<compile_context>
chip_gen: v6e
topology: v6e:2x2x1
jax: 0.10.0
libtpu: 0.0.40
codegen_flags: <defaults>
</compile_context>

<pallas_src>
import functools

import jax
import jax.numpy as jnp
import numpy as np
from jax import lax
from jax.experimental import pallas as pl
from jax.experimental.pallas import tpu as pltpu


def _block_kernel(x_ref, w_ref, b_ref, o_ref, *, TR, W, K, TC):
    """One (batch, cout-tile, row-tile) grid step.

    x_ref : (1, H+2, W, 3*Cin)  width-stacked, H-padded image (resident across row tiles)
    w_ref : (3, 3*Cin, TC)      BN-scale-folded conv weights for this Cout tile
    b_ref : (1, TC)             folded BN bias
    o_ref : (1, TR, W, TC)      output row tile (lane-dense: TC = 128)
    """
    r = pl.program_id(2)
    row0 = pl.multiple_of(r * TR, TR)

    acc = jnp.zeros((TR * W, TC), jnp.float32)
    # 3 H-taps, statically unrolled; width taps already folded into K = 3*Cin.
    # Row slicing is along an outer dim (not the (sublane, lane) plane) -> no relayout.
    for kh in range(3):
        rows = x_ref[0, pl.ds(row0 + kh, TR), :, :]           # (TR, W, 3*Cin)
        acc += jnp.dot(rows.reshape(TR * W, K), w_ref[kh],
                       preferred_element_type=jnp.float32)

    # fused BatchNorm bias (scale already folded into weights) + ReLU, f32 epilogue
    y = jnp.maximum(acc + b_ref[...], 0.0)
    o_ref[...] = y.reshape(1, TR, W, TC).astype(o_ref.dtype)


def block_forward(x_nchw, conv_w, gamma, beta, run_mean, run_var, eps=1e-5,
                  row_tile=8, compute_dtype=jnp.float32):
    """x_nchw: (N, Cin, H, W);  conv_w: (Cout, Cin, 3, 3). Returns (N, Cout, H, W)."""
    N, Cin, H, W = x_nchw.shape
    Cout = conv_w.shape[0]
    K = 3 * Cin
    TC = 128                                    # Cout tile (lane width)
    Cp = ((Cout + TC - 1) // TC) * TC           # Cout padded to a multiple of 128
    TR = row_tile if H % row_tile == 0 else H   # row tile must divide H
    # Note: W should be a multiple of 8 so the in-kernel (TR, W, K) -> (TR*W, K)
    # reshape is layout-preserving; it is still correct otherwise.

    # ---- glue (plain JAX): layout, halos, width-tap stacking, BN folding ----
    x_nhwc = jnp.transpose(x_nchw, (0, 2, 3, 1))                          # NCHW -> NHWC
    xw = jnp.pad(x_nhwc, ((0, 0), (0, 0), (1, 1), (0, 0)))                # width halo
    x_w3 = jnp.concatenate([xw[:, :, k:k + W, :] for k in range(3)], -1)  # (N, H, W, 3*Cin)
    x_w3 = jnp.pad(x_w3, ((0, 0), (1, 1), (0, 0), (0, 0)))                # height halo
    x_w3 = x_w3.astype(compute_dtype)

    scale = gamma / jnp.sqrt(run_var + eps)
    # (Cout, Cin, 3, 3) -> (kh, kw, Cin, Cout) -> (3, 3*Cin, Cout); fold BN scale per column
    w_stack = jnp.transpose(conv_w, (2, 3, 1, 0)).reshape(3, K, Cout) * scale[None, None, :]
    w_stack = jnp.pad(w_stack, ((0, 0), (0, 0), (0, Cp - Cout))).astype(compute_dtype)
    bias = jnp.pad(beta - run_mean * scale, ((0, Cp - Cout),)).reshape(1, Cp)
    bias = bias.astype(jnp.float32)

    kernel = functools.partial(_block_kernel, TR=TR, W=W, K=K, TC=TC)
    grid = (N, Cp // TC, H // TR)

    out_nhwc = pl.pallas_call(
        kernel,
        out_shape=jax.ShapeDtypeStruct((N, H, W, Cp), jnp.float32),
        grid_spec=pltpu.PrefetchScalarGridSpec(
            num_scalar_prefetch=0,
            grid=grid,
            in_specs=[
                # whole padded image per batch element; block index ignores (c, r)
                # so it stays VMEM-resident across the inner grid axes (no re-DMA).
                pl.BlockSpec((1, H + 2, W, K), lambda n, c, r: (n, 0, 0, 0)),
                pl.BlockSpec((3, K, TC), lambda n, c, r: (0, 0, c)),
                pl.BlockSpec((1, TC), lambda n, c, r: (0, c)),
            ],
            out_specs=pl.BlockSpec((1, TR, W, TC), lambda n, c, r: (n, r, 0, c)),
        ),
        compiler_params=pltpu.CompilerParams(
            dimension_semantics=("parallel", "parallel", "parallel"),
            vmem_limit_bytes=48 * 1024 * 1024,
        ),
    )(x_w3, w_stack, bias)

    return jnp.transpose(out_nhwc[..., :Cout], (0, 3, 1, 2))              # NHWC -> NCHW


def _reference(x_nchw, conv_w, gamma, beta, run_mean, run_var, eps=1e-5):
    """Pure-JAX reference (lax conv + inference BN + relu)."""
    y = lax.conv_general_dilated(
        x_nchw, conv_w, window_strides=(1, 1), padding=((1, 1), (1, 1)),
        dimension_numbers=("NCHW", "OIHW", "NCHW"))
    scale = gamma / jnp.sqrt(run_var + eps)
    bias = beta - run_mean * scale
    y = y * scale[None, :, None, None] + bias[None, :, None, None]
    return jnp.maximum(y, 0.0)


if __name__ == "__main__":
    key = jax.random.PRNGKey(0)
    k_x, k_w, k_g, k_b, k_m, k_v = jax.random.split(key, 6)

    N, Cin, Cout, H, W = 2, 4, 8, 16, 16

    x = jax.random.normal(k_x, (N, Cin, H, W), dtype=jnp.float32)
    fan_in = Cin * 3 * 3
    conv_w = jax.random.normal(k_w, (Cout, Cin, 3, 3), dtype=jnp.float32) / np.sqrt(fan_in)
    gamma = 1.0 + 0.1 * jax.random.normal(k_g, (Cout,), dtype=jnp.float32)
    beta = 0.1 * jax.random.normal(k_b, (Cout,), dtype=jnp.float32)
    run_mean = 0.1 * jax.random.normal(k_m, (Cout,), dtype=jnp.float32)
    run_var = jnp.abs(jax.random.normal(k_v, (Cout,), dtype=jnp.float32)) + 0.5

    out = block_forward(x, conv_w, gamma, beta, run_mean, run_var)
    out = jax.block_until_ready(out)

    ref = jax.block_until_ready(_reference(x, conv_w, gamma, beta, run_mean, run_var))
    np.testing.assert_allclose(np.asarray(out), np.asarray(ref), atol=1e-4, rtol=1e-4)

    print("KERNEL_OK")
</pallas_src>

<mosaic_0001>
module attributes {stable_mosaic.version = 11 : i64} {
  func.func @_block_kernel(%arg0: i32, %arg1: i32, %arg2: i32, %arg3: memref<1x18x16x12xf32, #tpu.memory_space<vmem>>, %arg4: memref<3x12x128xf32, #tpu.memory_space<vmem>>, %arg5: memref<1x128xf32, #tpu.memory_space<vmem>>, %arg6: memref<1x8x16x128xf32, #tpu.memory_space<vmem>>) attributes {dimension_semantics = [#tpu.dimension_semantics<parallel>, #tpu.dimension_semantics<parallel>, #tpu.dimension_semantics<parallel>], iteration_bounds = array<i64: 2, 1, 2>, scalar_prefetch = 0 : i64, scratch_operands = 0 : i64, tpu.core_type = #tpu.core_type<tc>, window_params = [{transform_indices = @transform_0, window_bounds = array<i64: 1, 18, 16, 12>}, {transform_indices = @transform_1, window_bounds = array<i64: 3, 12, 128>}, {transform_indices = @transform_2, window_bounds = array<i64: 1, 128>}, {transform_indices = @transform_3, window_bounds = array<i64: 1, 8, 16, 128>}]} {
    %c8_i32 = arith.constant 8 : i32
    %0 = arith.muli %arg2, %c8_i32 : i32
    %1 = tpu.assume_multiple %0, 8 : i32
    %cst = arith.constant 0.000000e+00 : f32
    %2 = vector.broadcast %cst : f32 to vector<128x128xf32>
    %c0_i32 = arith.constant 0 : i32
    %3 = arith.addi %1, %c0_i32 : i32
    %c0 = arith.constant 0 : index
    %4 = arith.index_cast %3 : i32 to index
    %c0_0 = arith.constant 0 : index
    %c0_1 = arith.constant 0 : index
    %5 = vector.load %arg3[%c0, %4, %c0_0, %c0_1] : memref<1x18x16x12xf32, #tpu.memory_space<vmem>>, vector<1x8x16x12xf32>
    %6 = vector.shape_cast %5 : vector<1x8x16x12xf32> to vector<8x16x12xf32>
    %7 = vector.shape_cast %6 : vector<8x16x12xf32> to vector<128x12xf32>
    %c0_2 = arith.constant 0 : index
    %c0_3 = arith.constant 0 : index
    %c0_4 = arith.constant 0 : index
    %8 = vector.load %arg4[%c0_2, %c0_3, %c0_4] : memref<3x12x128xf32, #tpu.memory_space<vmem>>, vector<1x12x128xf32>
    %9 = vector.shape_cast %8 : vector<1x12x128xf32> to vector<12x128xf32>
    %cst_5 = arith.constant dense<0.000000e+00> : vector<128x128xf32>
    %10 = tpu.matmul %7, %9, %cst_5 {dimension_numbers = #tpu.dot_dimension_numbers<[1], [0], [0], [1], [0, 0, 1, 1], [], []>} : vector<128x12xf32>, vector<12x128xf32>, vector<128x128xf32> -> vector<128x128xf32>
    %11 = arith.addf %2, %10 : vector<128x128xf32>
    %c1_i32 = arith.constant 1 : i32
    %12 = arith.addi %1, %c1_i32 : i32
    %c0_6 = arith.constant 0 : index
    %13 = arith.index_cast %12 : i32 to index
    %c0_7 = arith.constant 0 : index
    %c0_8 = arith.constant 0 : index
    %14 = vector.load %arg3[%c0_6, %13, %c0_7, %c0_8] : memref<1x18x16x12xf32, #tpu.memory_space<vmem>>, vector<1x8x16x12xf32>
    %15 = vector.shape_cast %14 : vector<1x8x16x12xf32> to vector<8x16x12xf32>
    %16 = vector.shape_cast %15 : vector<8x16x12xf32> to vector<128x12xf32>
    %c1 = arith.constant 1 : index
    %c0_9 = arith.constant 0 : index
    %c0_10 = arith.constant 0 : index
    %17 = vector.load %arg4[%c1, %c0_9, %c0_10] : memref<3x12x128xf32, #tpu.memory_space<vmem>>, vector<1x12x128xf32>
    %18 = vector.shape_cast %17 : vector<1x12x128xf32> to vector<12x128xf32>
    %cst_11 = arith.constant dense<0.000000e+00> : vector<128x128xf32>
    %19 = tpu.matmul %16, %18, %cst_11 {dimension_numbers = #tpu.dot_dimension_numbers<[1], [0], [0], [1], [0, 0, 1, 1], [], []>} : vector<128x12xf32>, vector<12x128xf32>, vector<128x128xf32> -> vector<128x128xf32>
    %20 = arith.addf %11, %19 : vector<128x128xf32>
    %c2_i32 = arith.constant 2 : i32
    %21 = arith.addi %1, %c2_i32 : i32
    %c0_12 = arith.constant 0 : index
    %22 = arith.index_cast %21 : i32 to index
    %c0_13 = arith.constant 0 : index
    %c0_14 = arith.constant 0 : index
    %23 = vector.load %arg3[%c0_12, %22, %c0_13, %c0_14] : memref<1x18x16x12xf32, #tpu.memory_space<vmem>>, vector<1x8x16x12xf32>
    %24 = vector.shape_cast %23 : vector<1x8x16x12xf32> to vector<8x16x12xf32>
    %25 = vector.shape_cast %24 : vector<8x16x12xf32> to vector<128x12xf32>
    %c2 = arith.constant 2 : index
    %c0_15 = arith.constant 0 : index
    %c0_16 = arith.constant 0 : index
    %26 = vector.load %arg4[%c2, %c0_15, %c0_16] : memref<3x12x128xf32, #tpu.memory_space<vmem>>, vector<1x12x128xf32>
    %27 = vector.shape_cast %26 : vector<1x12x128xf32> to vector<12x128xf32>
    %cst_17 = arith.constant dense<0.000000e+00> : vector<128x128xf32>
    %28 = tpu.matmul %25, %27, %cst_17 {dimension_numbers = #tpu.dot_dimension_numbers<[1], [0], [0], [1], [0, 0, 1, 1], [], []>} : vector<128x12xf32>, vector<12x128xf32>, vector<128x128xf32> -> vector<128x128xf32>
    %29 = arith.addf %20, %28 : vector<128x128xf32>
    %c0_18 = arith.constant 0 : index
    %c0_19 = arith.constant 0 : index
    %30 = vector.load %arg5[%c0_18, %c0_19] : memref<1x128xf32, #tpu.memory_space<vmem>>, vector<1x128xf32>
    %31 = vector.broadcast %30 : vector<1x128xf32> to vector<128x128xf32>
    %32 = arith.addf %29, %31 : vector<128x128xf32>
    %cst_20 = arith.constant 0.000000e+00 : f32
    %33 = vector.broadcast %cst_20 : f32 to vector<128x128xf32>
    %34 = arith.maximumf %32, %33 : vector<128x128xf32>
    %35 = vector.shape_cast %34 : vector<128x128xf32> to vector<1x8x16x128xf32>
    %c0_21 = arith.constant 0 : index
    %c0_22 = arith.constant 0 : index
    %c0_23 = arith.constant 0 : index
    %c0_24 = arith.constant 0 : index
    %36 = vector.load %arg6[%c0_21, %c0_22, %c0_23, %c0_24] : memref<1x8x16x128xf32, #tpu.memory_space<vmem>>, vector<1x8x16x128xf32>
    tpu.vector_store %arg6[%c0_21, %c0_22, %c0_23, %c0_24], %35 {strides = array<i32>} : memref<1x8x16x128xf32, #tpu.memory_space<vmem>>, vector<1x8x16x128xf32>,
    return
  }
  func.func @transform_0(%arg0: i32, %arg1: i32, %arg2: i32) -> (i32, i32, i32, i32) {
    %c0_i32 = arith.constant 0 : i32
    %c0_i32_0 = arith.constant 0 : i32
    %c0_i32_1 = arith.constant 0 : i32
    %c0_i32_2 = arith.constant 0 : i32
    return %arg0, %c0_i32, %c0_i32_0, %c0_i32_1 : i32, i32, i32, i32
  }
  func.func @transform_1(%arg0: i32, %arg1: i32, %arg2: i32) -> (i32, i32, i32) {
    %c0_i32 = arith.constant 0 : i32
    %c0_i32_0 = arith.constant 0 : i32
    %c0_i32_1 = arith.constant 0 : i32
    return %c0_i32, %c0_i32_0, %arg1 : i32, i32, i32
  }
  func.func @transform_2(%arg0: i32, %arg1: i32, %arg2: i32) -> (i32, i32) {
    %c0_i32 = arith.constant 0 : i32
    %c0_i32_0 = arith.constant 0 : i32
    return %c0_i32, %arg1 : i32, i32
  }
  func.func @transform_3(%arg0: i32, %arg1: i32, %arg2: i32) -> (i32, i32, i32, i32) {
    %c0_i32 = arith.constant 0 : i32
    %c0_i32_0 = arith.constant 0 : i32
    return %arg0, %arg2, %c0_i32, %arg1 : i32, i32, i32, i32
  }
}

</mosaic_0001>

<llo_original>
// kernel: tpu_custom_call.1
$region0: #{tpu_custom_call.1}
  #allocation0 [shape = 'u32[]', space=smem, size = 0x4, offset = 0x4, fixed_abs, tag = 'smem constant byte address 0x4 - core index']
  #allocation1 [shape = 'u32[144,128]{1,0:T(1,128)}', space=vmem, size = 0x12000, scoped, tag = 'internal scratch']
  %s0 = inlined_call_operand.vmem [shape: f32[2,18,16,12], index: 0, kind: input, shape index: {}]
  %s1 = inlined_call_operand.vmem [shape: f32[3,12,128], index: 1, kind: input, shape index: {}]
  %s2 = inlined_call_operand.vmem [shape: f32[1,128], index: 2, kind: input, shape index: {}]
  %s3 = inlined_call_operand.hbm [shape: f32[2,16,16,128], index: 3, kind: output, shape index: {}]
  %s4 = sld [smem:[#allocation0]]
  $region45: #{tpu_custom_call.1} parent=0
    _
  %s6 = ssub.s32 1, %s4
  %s7 = scalar_select 0, %s6, %s4
  $region1: #{tpu_custom_call.1} parent=0
    #allocation2 [shape = 'u8[131072]{0}', space=vmem, size = 0x20000, scoped, tag = 'output window, operand 0']
    #allocation3 [shape = 's32[2]{0}', space=sflag, size = 0x8, scoped, tag = 'scoped memory for tpu_custom_call.1']
    %8 = vsyncpa [#allocation3], 0
    %s9 = scalar_lea.sflag [#allocation3], 1
    %10 = vsyncpa %s9, 0
    loop: start=0, step=1, limit=6
    $region2: #{tpu_custom_call.1} parent=1 // loop_pre_header
      _
    $region3: #{tpu_custom_call.1} parent=1 // loop_header
      %s12 = sphi 0, %s16
      %p13 = scmp.ge.s32.totalorder %s12, 6
      %s19 = sphi 0, %s38
      %s20 = sphi 0, %s34
      %s21 = sphi 0, %s30
      %s22 = sphi 0, %s19
      %s23 = sphi 0, %s20
      %s24 = sphi 0, %s21
      %s25 = sphi 0, %s22
      %s26 = sphi 0, %s23
      %s27 = sphi 0, %s24
      %s41 = sphi 0, %s43
      %s44 = sphi 0, %s41
      %s45 = sphi 0, %s44
      %s61 = sphi 0, %s45
      %s67 = sphi 0, %s69
      %s70 = sphi 0, %s67
      %s71 = sphi 0, %s70
      %s87 = sphi 0, %s71
      %s93 = sphi 0, %s95
      %s96 = sphi 0, %s93
      %s97 = sphi 0, %s96
      %s113 = sphi 0, %s97
      %s123 = sphi 0, %s125
      %s126 = sphi 0, %s123
      %s127 = sphi 0, %s126
      %s143 = sphi 0, %s127
    $region4: #{tpu_custom_call.1} parent=1 // loop_header_branch
      %15 = sbr.rel (%p13) target = $region8
    $region5: #{tpu_custom_call.1} parent=1 // loop_body
      %s17 = ssub.s32 %s12, 1
      %s18 = ssub.s32 %s12, 2
      %s28 = sadd.s32 1, %s21
      %p29 = scmp.ge.s32.totalorder %s28, 2
      %s30 = scalar_select %p29, 0, %s28
      %s31 = sadd.s32 1, %s20
      %s32 = scalar_select %p29, %s31, %s20
      %p33 = scmp.ge.s32.totalorder %s32, 1
      %s34 = scalar_select %p33, 0, %s32
      %s35 = sadd.s32 1, %s19
      %s36 = scalar_select %p33, %s35, %s19
      %p37 = scmp.ge.s32.totalorder %s36, 2
      %s38 = scalar_select %p37, 0, %s36
      %s39 = ssub.s32 %s19, %s38
      %p40 = scmp.eq.s32.totalorder %s39, 0
      %s42 = sadd.s32 %s41, 1
      %s43 = scalar_select %p40, %s41, %s42
      %p46 = pneg %p40
      %p47 = scmp.eq.s32.totalorder %s12, 3
      %p48 = por %p46, %p47
      %p49 = scmp.ne.s32.totalorder %s41, %s44
      %p50 = scmp.eq.s32.totalorder %s12, 0
      %p51 = por %p49, %p50
      %p52 = scmp.ne.s32.totalorder %s41, %s44
      %p53 = scmp.eq.s32.totalorder %s17, 3
      %p54 = por %p52, %p53
      %p55 = scmp.ne.s32.totalorder %s44, %s45
      %p56 = scmp.eq.s32.totalorder %s17, 0
      %p57 = por %p55, %p56
      %p58 = scmp.ne.s32.totalorder %s44, %s45
      %p59 = scmp.eq.s32.totalorder %s18, 3
      %p60 = por %p58, %p59
      %p62 = scmp.ne.s32.totalorder %s45, %s61
      %p63 = scmp.eq.s32.totalorder %s18, 0
      %p64 = por %p62, %p63
      %s65 = ssub.s32 %s20, %s34
      %p66 = scmp.eq.s32.totalorder %s65, 0
      %s68 = sadd.s32 %s67, 1
      %s69 = scalar_select %p66, %s67, %s68
      %p72 = pneg %p66
      %p73 = scmp.eq.s32.totalorder %s12, 3
      %p74 = por %p72, %p73
      %p75 = scmp.ne.s32.totalorder %s67, %s70
      %p76 = scmp.eq.s32.totalorder %s12, 0
      %p77 = por %p75, %p76
      %p78 = scmp.ne.s32.totalorder %s67, %s70
      %p79 = scmp.eq.s32.totalorder %s17, 3
      %p80 = por %p78, %p79
      %p81 = scmp.ne.s32.totalorder %s70, %s71
      %p82 = scmp.eq.s32.totalorder %s17, 0
      %p83 = por %p81, %p82
      %p84 = scmp.ne.s32.totalorder %s70, %s71
      %p85 = scmp.eq.s32.totalorder %s18, 3
      %p86 = por %p84, %p85
      %p88 = scmp.ne.s32.totalorder %s71, %s87
      %p89 = scmp.eq.s32.totalorder %s18, 0
      %p90 = por %p88, %p89
      %s91 = ssub.s32 %s20, %s34
      %p92 = scmp.eq.s32.totalorder %s91, 0
      %s94 = sadd.s32 %s93, 1
      %s95 = scalar_select %p92, %s93, %s94
      %p98 = pneg %p92
      %p99 = scmp.eq.s32.totalorder %s12, 3
      %p100 = por %p98, %p99
      %p101 = scmp.ne.s32.totalorder %s93, %s96
      %p102 = scmp.eq.s32.totalorder %s12, 0
      %p103 = por %p101, %p102
      %p104 = scmp.ne.s32.totalorder %s93, %s96
      %p105 = scmp.eq.s32.totalorder %s17, 3
      %p106 = por %p104, %p105
      %p107 = scmp.ne.s32.totalorder %s96, %s97
      %p108 = scmp.eq.s32.totalorder %s17, 0
      %p109 = por %p107, %p108
      %p110 = scmp.ne.s32.totalorder %s96, %s97
      %p111 = scmp.eq.s32.totalorder %s18, 3
      %p112 = por %p110, %p111
      %p114 = scmp.ne.s32.totalorder %s97, %s113
      %p115 = scmp.eq.s32.totalorder %s18, 0
      %p116 = por %p114, %p115
      %s117 = ssub.s32 %s19, %s38
      %s118 = ssub.s32 %s21, %s30
      %s119 = sor.u32 %s117, %s118
      %s120 = ssub.s32 %s20, %s34
      %s121 = sor.u32 %s119, %s120
      %p122 = scmp.eq.s32.totalorder %s121, 0
      %s124 = sadd.s32 %s123, 1
      %s125 = scalar_select %p122, %s123, %s124
      %p128 = pneg %p122
      %p129 = scmp.eq.s32.totalorder %s12, 3
      %p130 = por %p128, %p129
      %p131 = scmp.ne.s32.totalorder %s123, %s126
      %p132 = scmp.eq.s32.totalorder %s12, 0
      %p133 = por %p131, %p132
      %p134 = scmp.ne.s32.totalorder %s123, %s126
      %p135 = scmp.eq.s32.totalorder %s17, 3
      %p136 = por %p134, %p135
      %p137 = scmp.ne.s32.totalorder %s126, %s127
      %p138 = scmp.eq.s32.totalorder %s17, 0
      %p139 = por %p137, %p138
      %p140 = scmp.ne.s32.totalorder %s126, %s127
      %p141 = scmp.eq.s32.totalorder %s18, 3
      %p142 = por %p140, %p141
      %p144 = scmp.ne.s32.totalorder %s127, %s143
      %p145 = scmp.eq.s32.totalorder %s18, 0
      %p146 = por %p144, %p145
      %p147 = scmp.le.s32.totalorder 1, %s12
      %p148 = scmp.lt.s32.totalorder %s12, 5
      %p149 = pnand %p147, %p148
      %p150 = pneg %p149
      // Predicated region
      $region9: #{tpu_custom_call.1} parent=5 // pred_check
        _
      $region10: #{tpu_custom_call.1} parent=5 // pred_check_branch
        %152 = sbr.rel (%p149) target = $region12
      $region11: #{tpu_custom_call.1} parent=5 // pred_region
        %s153 = ssub.s32 %s12, 1
        // Predicated region
        $region13: #{tpu_custom_call.1} parent=11 // pred_check
          %p154 = pneg %p83
        $region14: #{tpu_custom_call.1} parent=11 // pred_check_branch
          %156 = sbr.rel (%p154) target = $region16
        $region15: #{tpu_custom_call.1} parent=11 // pred_region
          %p157 = scmp.lt.s32.totalorder %s23, 0
          %s158 = scalar_select %p157, %s23, 0
          %s159 = smul.addr %s158, 8
          %s160 = scalar_lea.vmem %s1, %s159
        $region16: #{tpu_custom_call.1} parent=11 // pred_fallthru
          _
        // Predicated region
        $region17: #{tpu_custom_call.1} parent=11 // pred_check
          %p161 = pneg %p109
        $region18: #{tpu_custom_call.1} parent=11 // pred_check_branch
          %163 = sbr.rel (%p161) target = $region20
        $region19: #{tpu_custom_call.1} parent=11 // pred_region
          %p164 = scmp.lt.s32.totalorder %s23, 0
          %s165 = scalar_select %p164, %s23, 0
          %s166 = scalar_lea.vmem %s2, %s165
        $region20: #{tpu_custom_call.1} parent=11 // pred_fallthru
          _
      $region12: #{tpu_custom_call.1} parent=5 // pred_fallthru
        _
      %p167 = scmp.lt.s32.totalorder %s12, 4
      // Predicated region
      $region21: #{tpu_custom_call.1} parent=5 // pred_check
        %p168 = pneg %p167
      $region22: #{tpu_custom_call.1} parent=5 // pred_check_branch
        %170 = sbr.rel (%p168) target = $region24
      $region23: #{tpu_custom_call.1} parent=5 // pred_region
        // Predicated region
        $region25: #{tpu_custom_call.1} parent=23 // pred_check
          %p171 = pneg %p51
        $region26: #{tpu_custom_call.1} parent=23 // pred_check_branch
          %173 = sbr.rel (%p171) target = $region28
        $region27: #{tpu_custom_call.1} parent=23 // pred_region
          %p174 = scmp.lt.s32.totalorder %s19, 1
          %s175 = scalar_select %p174, %s19, 1
          %s176 = smul.addr %s175, 36
          %s177 = smul.addr %s176, 8
          %s178 = scalar_lea.vmem %s0, %s177
        $region28: #{tpu_custom_call.1} parent=23 // pred_fallthru
          _
      $region24: #{tpu_custom_call.1} parent=5 // pred_fallthru
        _
      %p179 = scmp.le.s32.totalorder 1, %s12
      %p180 = scmp.lt.s32.totalorder %s12, 5
      %p181 = pnand %p179, %p180
      %p182 = pneg %p181
      // Predicated region
      $region29: #{tpu_custom_call.1} parent=5 // pred_check
        _
      $region30: #{tpu_custom_call.1} parent=5 // pred_check_branch
        %184 = sbr.rel (%p181) target = $region32
      $region31: #{tpu_custom_call.1} parent=5 // pred_region
        %s185 = ssub.s32 %s12, 1
        %p186 = scmp.lt.s32.totalorder %s22, 1
        %s187 = scalar_select %p186, %s22, 1
        %s188 = smul.addr %s187, 36
        %s189 = smul.addr %s188, 8
        %s190 = scalar_lea.vmem %s0, %s189
        %p191 = pneg %p57
        %p192 = pneg %p54
        %p193 = scmp.lt.s32.totalorder %s23, 0
        %s194 = scalar_select %p193, %s23, 0
        %s195 = smul.addr %s194, 8
        %s196 = scalar_lea.vmem %s1, %s195
        %p197 = pneg %p83
        %p198 = pneg %p80
        %p199 = scmp.lt.s32.totalorder %s23, 0
        %s200 = scalar_select %p199, %s23, 0
        %s201 = scalar_lea.vmem %s2, %s200
        %p202 = pneg %p109
        %p203 = pneg %p106
        %p204 = pneg %p139
        %p205 = pneg %p136
        %s206 = sand.u32 %s126, 1
        %s207 = scalar_lea.sflag [#allocation3], %s206
        %s208 = sand.u32 %s126, 1
        %s209 = smul.addr %s208, 128
        %s210 = scalar_lea.vmem [#allocation2], %s209
        %p211 = scmp.lt.s32.totalorder %s22, 1
        %s212 = scalar_select %p211, %s22, 1
        %s213 = smul.addr %s212, 36
        %s214 = smul.addr %s213, 8
        %s215 = scalar_lea.vmem %s0, %s214
        %p216 = scmp.lt.s32.totalorder %s23, 0
        %s217 = scalar_select %p216, %s23, 0
        %s218 = smul.addr %s217, 8
        %s219 = scalar_lea.vmem %s1, %s218
        %p220 = scmp.lt.s32.totalorder %s23, 0
        %s221 = scalar_select %p220, %s23, 0
        %s222 = scalar_lea.vmem %s2, %s221
        %s223 = smul.u32 8, %s24
        %s224 = smul.u32 %s24, 8
        %s225 = smul.u32 %s224, 16
        %s226 = scalar_lea.vmem %s215, %s225
        %v227 = vld [vmem:[%s226] sm:$0xff]
        %v228 = vld [vmem:[%s226 + $0x8] sm:$0xff]
        %v229 = vld [vmem:[%s226 + $0x10] sm:$0xff]
        %v230 = vld [vmem:[%s226 + $0x18] sm:$0xff]
        %v231 = vld [vmem:[%s226 + $0x20] sm:$0xff]
        %v232 = vld [vmem:[%s226 + $0x28] sm:$0xff]
        %v233 = vld [vmem:[%s226 + $0x30] sm:$0xff]
        %v234 = vld [vmem:[%s226 + $0x38] sm:$0xff]
        %v235 = vld [vmem:[%s226 + $0x40] sm:$0xff]
        %v236 = vld [vmem:[%s226 + $0x48] sm:$0xff]
        %v237 = vld [vmem:[%s226 + $0x50] sm:$0xff]
        %v238 = vld [vmem:[%s226 + $0x58] sm:$0xff]
        %v239 = vld [vmem:[%s226 + $0x60] sm:$0xff]
        %v240 = vld [vmem:[%s226 + $0x68] sm:$0xff]
        %v241 = vld [vmem:[%s226 + $0x70] sm:$0xff]
        %v242 = vld [vmem:[%s226 + $0x78] sm:$0xff]
        %v243 = vld [vmem:[%s219] sm:$0xff]
        %v244 = vld [vmem:[%s219 + $0x8] sm:$0xf]
        %s245 = sadd.s32 %s224, 1
        %s246 = smul.u32 %s245, 16
        %s247 = scalar_lea.vmem %s215, %s246
        %v248 = vld [vmem:[%s247] sm:$0xff]
        %v249 = vld [vmem:[%s247 + $0x8] sm:$0xff]
        %v250 = vld [vmem:[%s247 + $0x10] sm:$0xff]
        %v251 = vld [vmem:[%s247 + $0x18] sm:$0xff]
        %v252 = vld [vmem:[%s247 + $0x20] sm:$0xff]
        %v253 = vld [vmem:[%s247 + $0x28] sm:$0xff]
        %v254 = vld [vmem:[%s247 + $0x30] sm:$0xff]
        %v255 = vld [vmem:[%s247 + $0x38] sm:$0xff]
        %v256 = vld [vmem:[%s247 + $0x40] sm:$0xff]
        %v257 = vld [vmem:[%s247 + $0x48] sm:$0xff]
        %v258 = vld [vmem:[%s247 + $0x50] sm:$0xff]
        %v259 = vld [vmem:[%s247 + $0x58] sm:$0xff]
        %v260 = vld [vmem:[%s247 + $0x60] sm:$0xff]
        %v261 = vld [vmem:[%s247 + $0x68] sm:$0xff]
        %v262 = vld [vmem:[%s247 + $0x70] sm:$0xff]
        %v263 = vld [vmem:[%s247 + $0x78] sm:$0xff]
        %s264 = scalar_lea.vmem %s219, 16
        %v265 = vld [vmem:[%s264] sm:$0xff]
        %v266 = vld [vmem:[%s264 + $0x8] sm:$0xf]
        %vm267 = vcmask 97280
        %v269 = vsel %vm267, %v248, 0
        %v272 = vsel %vm267, %v249, 0
        %v275 = vsel %vm267, %v250, 0
        %v278 = vsel %vm267, %v251, 0
        %v281 = vsel %vm267, %v252, 0
        %v284 = vsel %vm267, %v253, 0
        %v287 = vsel %vm267, %v254, 0
        %v290 = vsel %vm267, %v255, 0
        %v293 = vsel %vm267, %v256, 0
        %v296 = vsel %vm267, %v257, 0
        %v299 = vsel %vm267, %v258, 0
        %v302 = vsel %vm267, %v259, 0
        %v305 = vsel %vm267, %v260, 0
        %v308 = vsel %vm267, %v261, 0
        %v311 = vsel %vm267, %v262, 0
        %v314 = vsel %vm267, %v263, 0
        %vm316 = vcmask 1043456
        %v318 = vsel %vm316, %v266, 0
        %320 = vmatprep.subr.mxu0 0.0
        %321 = vmatpush1.msra.mxu0 0.0
        %322 = vmatprep.subr.mxu0 0.0
        %323 = vmatpush1.msra.mxu0 0.0
        %324 = vmatprep.subr.mxu0 0.0
        %325 = vmatpush1.msra.mxu0 0.0
        %326 = vmatprep.subr.mxu0 0.0
        %327 = vmatpush1.msra.mxu0 0.0
        %328 = vmatprep.subr.mxu0 0.0
        %329 = vmatpush1.msra.mxu0 0.0
        %330 = vmatprep.subr.mxu0 0.0
        %331 = vmatpush1.msra.mxu0 0.0
        %332 = vmatprep.subr.mxu0 0.0
        %333 = vmatpush1.msra.mxu0 0.0
        %334 = vmatprep.subr.mxu0 0.0
        %335 = vmatpush1.msra.mxu0 0.0
        %336 = vmatprep.subr.mxu0 0.0
        %337 = vmatpush1.msra.mxu0 0.0
        %338 = vmatprep.subr.mxu0 0.0
        %339 = vmatpush1.msra.mxu0 0.0
        %340 = vmatprep.subr.mxu0 0.0
        %341 = vmatpush1.msra.mxu0 0.0
        %342 = vmatprep.subr.mxu0 0.0
        %343 = vmatpush1.msra.mxu0 0.0
        %344 = vmatprep.subr.mxu0 0.0
        %345 = vmatpush1.msra.mxu0 0.0
        %346 = vmatprep.subr.mxu0 0.0
        %347 = vmatpush1.msra.mxu0 0.0
        %348 = vmatprep.subr.mxu0 0.0
        %349 = vmatpush1.msra.mxu0 %v318
        %350 = vmatprep.subr.mxu0 0.0
        %351 = vmatpush1.msra.mxu0 %v265
        %352 = vmatprep.subr.mxu0 0.0
        %353 = vmatpush2.msra.mxu0 0.0
        %354 = vmatprep.subr.mxu0 0.0
        %355 = vmatpush2.msra.mxu0 0.0
        %356 = vmatprep.subr.mxu0 0.0
        %357 = vmatpush2.msra.mxu0 0.0
        %358 = vmatprep.subr.mxu0 0.0
        %359 = vmatpush2.msra.mxu0 0.0
        %360 = vmatprep.subr.mxu0 0.0
        %361 = vmatpush2.msra.mxu0 0.0
        %362 = vmatprep.subr.mxu0 0.0
        %363 = vmatpush2.msra.mxu0 0.0
        %364 = vmatprep.subr.mxu0 0.0
        %365 = vmatpush2.msra.mxu0 0.0
        %366 = vmatprep.subr.mxu0 0.0
        %367 = vmatpush2.msra.mxu0 0.0
        %368 = vmatprep.subr.mxu0 0.0
        %369 = vmatpush2.msra.mxu0 0.0
        %370 = vmatprep.subr.mxu0 0.0
        %371 = vmatpush2.msra.mxu0 0.0
        %372 = vmatprep.subr.mxu0 0.0
        %373 = vmatpush2.msra.mxu0 0.0
        %374 = vmatprep.subr.mxu0 0.0
        %375 = vmatpush2.msra.mxu0 0.0
        %376 = vmatprep.subr.mxu0 0.0
        %377 = vmatpush2.msra.mxu0 0.0
        %378 = vmatprep.subr.mxu0 0.0
        %379 = vmatpush2.msra.mxu0 0.0
        %380 = vmatprep.subr.mxu0 0.0
        %381 = vmatpush2.msra.mxu0 0.0
        %382 = vmatprep.subr.mxu0 0.0
        %383 = vmatpush2.msra.mxu0 0.0
        %384 = vmatprep.mubr.f32.mxu0 0.0
        %385 = vmatmul.mubr.f32.gmra.mxu0 %v269
        %v386 = vpop.f32.mrf.mxu0
        %v387 = vadd.f32 0.0, %v386
        %v388 = vpop.f32.mrf.mxu0
        %389 = vmatprep.mubr.f32.mxu0 0.0
        %390 = vmatmul.mubr.f32.gmra.mxu0 %v272
        %v391 = vpop.f32.mrf.mxu0
        %v392 = vadd.f32 0.0, %v391
        %v393 = vpop.f32.mrf.mxu0
        %394 = vmatprep.mubr.f32.mxu0 0.0
        %395 = vmatmul.mubr.f32.gmra.mxu0 %v275
        %v396 = vpop.f32.mrf.mxu0
        %v397 = vadd.f32 0.0, %v396
        %v398 = vpop.f32.mrf.mxu0
        %399 = vmatprep.mubr.f32.mxu0 0.0
        %400 = vmatmul.mubr.f32.gmra.mxu0 %v278
        %v401 = vpop.f32.mrf.mxu0
        %v402 = vadd.f32 0.0, %v401
        %v403 = vpop.f32.mrf.mxu0
        %404 = vmatprep.mubr.f32.mxu0 0.0
        %405 = vmatmul.mubr.f32.gmra.mxu0 %v281
        %v406 = vpop.f32.mrf.mxu0
        %v407 = vadd.f32 0.0, %v406
        %v408 = vpop.f32.mrf.mxu0
        %409 = vmatprep.mubr.f32.mxu0 0.0
        %410 = vmatmul.mubr.f32.gmra.mxu0 %v284
        %v411 = vpop.f32.mrf.mxu0
        %v412 = vadd.f32 0.0, %v411
        %v413 = vpop.f32.mrf.mxu0
        %414 = vmatprep.mubr.f32.mxu0 0.0
        %415 = vmatmul.mubr.f32.gmra.mxu0 %v287
        %v416 = vpop.f32.mrf.mxu0
        %v417 = vadd.f32 0.0, %v416
        %v418 = vpop.f32.mrf.mxu0
        %419 = vmatprep.mubr.f32.mxu0 0.0
        %420 = vmatmul.mubr.f32.gmra.mxu0 %v290
        %v421 = vpop.f32.mrf.mxu0
        %v422 = vadd.f32 0.0, %v421
        %v423 = vpop.f32.mrf.mxu0
        %424 = vmatprep.mubr.f32.mxu0 0.0
        %425 = vmatmul.mubr.f32.gmra.mxu0 %v293
        %v426 = vpop.f32.mrf.mxu0
        %v427 = vadd.f32 0.0, %v426
        %v428 = vpop.f32.mrf.mxu0
        %429 = vmatprep.mubr.f32.mxu0 0.0
        %430 = vmatmul.mubr.f32.gmra.mxu0 %v296
        %v431 = vpop.f32.mrf.mxu0
        %v432 = vadd.f32 0.0, %v431
        %v433 = vpop.f32.mrf.mxu0
        %434 = vmatprep.mubr.f32.mxu0 0.0
        %435 = vmatmul.mubr.f32.gmra.mxu0 %v299
        %v436 = vpop.f32.mrf.mxu0
        %v437 = vadd.f32 0.0, %v436
        %v438 = vpop.f32.mrf.mxu0
        %439 = vmatprep.mubr.f32.mxu0 0.0
        %440 = vmatmul.mubr.f32.gmra.mxu0 %v302
        %v441 = vpop.f32.mrf.mxu0
        %v442 = vadd.f32 0.0, %v441
        %v443 = vpop.f32.mrf.mxu0
        %444 = vmatprep.mubr.f32.mxu0 0.0
        %445 = vmatmul.mubr.f32.gmra.mxu0 %v305
        %v446 = vpop.f32.mrf.mxu0
        %v447 = vadd.f32 0.0, %v446
        %v448 = vpop.f32.mrf.mxu0
        %449 = vmatprep.mubr.f32.mxu0 0.0
        %450 = vmatmul.mubr.f32.gmra.mxu0 %v308
        %v451 = vpop.f32.mrf.mxu0
        %v452 = vadd.f32 0.0, %v451
        %v453 = vpop.f32.mrf.mxu0
        %454 = vmatprep.mubr.f32.mxu0 0.0
        %455 = vmatmul.mubr.f32.gmra.mxu0 %v311
        %v456 = vpop.f32.mrf.mxu0
        %v457 = vadd.f32 0.0, %v456
        %v458 = vpop.f32.mrf.mxu0
        %459 = vmatprep.mubr.f32.mxu0 0.0
        %460 = vmatmul.mubr.f32.gmra.mxu0 %v314
        %v461 = vpop.f32.mrf.mxu0
        %v462 = vadd.f32 0.0, %v461
        %v463 = vpop.f32.mrf.mxu0
        %464 = vdwg.mxu0
        %v466 = vsel %vm267, %v227, 0
        %v469 = vsel %vm267, %v228, 0
        %v472 = vsel %vm267, %v229, 0
        %v475 = vsel %vm267, %v230, 0
        %v478 = vsel %vm267, %v231, 0
        %v481 = vsel %vm267, %v232, 0
        %v484 = vsel %vm267, %v233, 0
        %v487 = vsel %vm267, %v234, 0
        %v490 = vsel %vm267, %v235, 0
        %v493 = vsel %vm267, %v236, 0
        %v496 = vsel %vm267, %v237, 0
        %v499 = vsel %vm267, %v238, 0
        %v502 = vsel %vm267, %v239, 0
        %v505 = vsel %vm267, %v240, 0
        %v508 = vsel %vm267, %v241, 0
        %v511 = vsel %vm267, %v242, 0
        %v514 = vsel %vm316, %v244, 0
        %516 = vmatprep.subr.mxu0 0.0
        %517 = vmatpush1.msra.mxu0 0.0
        %518 = vmatprep.subr.mxu0 0.0
        %519 = vmatpush1.msra.mxu0 0.0
        %520 = vmatprep.subr.mxu0 0.0
        %521 = vmatpush1.msra.mxu0 0.0
        %522 = vmatprep.subr.mxu0 0.0
        %523 = vmatpush1.msra.mxu0 0.0
        %524 = vmatprep.subr.mxu0 0.0
        %525 = vmatpush1.msra.mxu0 0.0
        %526 = vmatprep.subr.mxu0 0.0
        %527 = vmatpush1.msra.mxu0 0.0
        %528 = vmatprep.subr.mxu0 0.0
        %529 = vmatpush1.msra.mxu0 0.0
        %530 = vmatprep.subr.mxu0 0.0
        %531 = vmatpush1.msra.mxu0 0.0
        %532 = vmatprep.subr.mxu0 0.0
        %533 = vmatpush1.msra.mxu0 0.0
        %534 = vmatprep.subr.mxu0 0.0
        %535 = vmatpush1.msra.mxu0 0.0
        %536 = vmatprep.subr.mxu0 0.0
        %537 = vmatpush1.msra.mxu0 0.0
        %538 = vmatprep.subr.mxu0 0.0
        %539 = vmatpush1.msra.mxu0 0.0
        %540 = vmatprep.subr.mxu0 0.0
        %541 = vmatpush1.msra.mxu0 0.0
        %542 = vmatprep.subr.mxu0 0.0
        %543 = vmatpush1.msra.mxu0 0.0
        %544 = vmatprep.subr.mxu0 0.0
        %545 = vmatpush1.msra.mxu0 %v514
        %546 = vmatprep.subr.mxu0 0.0
        %547 = vmatpush1.msra.mxu0 %v243
        %548 = vmatprep.subr.mxu0 0.0
        %549 = vmatpush2.msra.mxu0 0.0
        %550 = vmatprep.subr.mxu0 0.0
        %551 = vmatpush2.msra.mxu0 0.0
        %552 = vmatprep.subr.mxu0 0.0
        %553 = vmatpush2.msra.mxu0 0.0
        %554 = vmatprep.subr.mxu0 0.0
        %555 = vmatpush2.msra.mxu0 0.0
        %556 = vmatprep.subr.mxu0 0.0
        %557 = vmatpush2.msra.mxu0 0.0
        %558 = vmatprep.subr.mxu0 0.0
        %559 = vmatpush2.msra.mxu0 0.0
        %560 = vmatprep.subr.mxu0 0.0
        %561 = vmatpush2.msra.mxu0 0.0
        %562 = vmatprep.subr.mxu0 0.0
        %563 = vmatpush2.msra.mxu0 0.0
        %564 = vmatprep.subr.mxu0 0.0
        %565 = vmatpush2.msra.mxu0 0.0
        %566 = vmatprep.subr.mxu0 0.0
        %567 = vmatpush2.msra.mxu0 0.0
        %568 = vmatprep.subr.mxu0 0.0
        %569 = vmatpush2.msra.mxu0 0.0
        %570 = vmatprep.subr.mxu0 0.0
        %571 = vmatpush2.msra.mxu0 0.0
        %572 = vmatprep.subr.mxu0 0.0
        %573 = vmatpush2.msra.mxu0 0.0
        %574 = vmatprep.subr.mxu0 0.0
        %575 = vmatpush2.msra.mxu0 0.0
        %576 = vmatprep.subr.mxu0 0.0
        %577 = vmatpush2.msra.mxu0 0.0
        %578 = vmatprep.subr.mxu0 0.0
        %579 = vmatpush2.msra.mxu0 0.0
        %580 = vmatprep.mubr.f32.mxu0 0.0
        %581 = vmatmul.mubr.f32.gmra.mxu0 %v466
        %v582 = vpop.f32.mrf.mxu0
        %v583 = vadd.f32 %v387, %v582
        %v584 = vpop.f32.mrf.mxu0
        %585 = vmatprep.mubr.f32.mxu0 0.0
        %586 = vmatmul.mubr.f32.gmra.mxu0 %v469
        %v587 = vpop.f32.mrf.mxu0
        %v588 = vadd.f32 %v392, %v587
        %v589 = vpop.f32.mrf.mxu0
        %590 = vmatprep.mubr.f32.mxu0 0.0
        %591 = vmatmul.mubr.f32.gmra.mxu0 %v472
        %v592 = vpop.f32.mrf.mxu0
        %v593 = vadd.f32 %v397, %v592
        %v594 = vpop.f32.mrf.mxu0
        %595 = vmatprep.mubr.f32.mxu0 0.0
        %596 = vmatmul.mubr.f32.gmra.mxu0 %v475
        %v597 = vpop.f32.mrf.mxu0
        %v598 = vadd.f32 %v402, %v597
        %v599 = vpop.f32.mrf.mxu0
        %600 = vmatprep.mubr.f32.mxu0 0.0
        %601 = vmatmul.mubr.f32.gmra.mxu0 %v478
        %v602 = vpop.f32.mrf.mxu0
        %v603 = vadd.f32 %v407, %v602
        %v604 = vpop.f32.mrf.mxu0
        %605 = vmatprep.mubr.f32.mxu0 0.0
        %606 = vmatmul.mubr.f32.gmra.mxu0 %v481
        %v607 = vpop.f32.mrf.mxu0
        %v608 = vadd.f32 %v412, %v607
        %v609 = vpop.f32.mrf.mxu0
        %610 = vmatprep.mubr.f32.mxu0 0.0
        %611 = vmatmul.mubr.f32.gmra.mxu0 %v484
        %v612 = vpop.f32.mrf.mxu0
        %v613 = vadd.f32 %v417, %v612
        %v614 = vpop.f32.mrf.mxu0
        %615 = vmatprep.mubr.f32.mxu0 0.0
        %616 = vmatmul.mubr.f32.gmra.mxu0 %v487
        %v617 = vpop.f32.mrf.mxu0
        %v618 = vadd.f32 %v422, %v617
        %v619 = vpop.f32.mrf.mxu0
        %620 = vmatprep.mubr.f32.mxu0 0.0
        %621 = vmatmul.mubr.f32.gmra.mxu0 %v490
        %v622 = vpop.f32.mrf.mxu0
        %v623 = vadd.f32 %v427, %v622
        %v624 = vpop.f32.mrf.mxu0
        %625 = vmatprep.mubr.f32.mxu0 0.0
        %626 = vmatmul.mubr.f32.gmra.mxu0 %v493
        %v627 = vpop.f32.mrf.mxu0
        %v628 = vadd.f32 %v432, %v627
        %v629 = vpop.f32.mrf.mxu0
        %630 = vmatprep.mubr.f32.mxu0 0.0
        %631 = vmatmul.mubr.f32.gmra.mxu0 %v496
        %v632 = vpop.f32.mrf.mxu0
        %v633 = vadd.f32 %v437, %v632
        %v634 = vpop.f32.mrf.mxu0
        %635 = vmatprep.mubr.f32.mxu0 0.0
        %636 = vmatmul.mubr.f32.gmra.mxu0 %v499
        %v637 = vpop.f32.mrf.mxu0
        %v638 = vadd.f32 %v442, %v637
        %v639 = vpop.f32.mrf.mxu0
        %640 = vmatprep.mubr.f32.mxu0 0.0
        %641 = vmatmul.mubr.f32.gmra.mxu0 %v502
        %v642 = vpop.f32.mrf.mxu0
        %v643 = vadd.f32 %v447, %v642
        %v644 = vpop.f32.mrf.mxu0
        %645 = vmatprep.mubr.f32.mxu0 0.0
        %646 = vmatmul.mubr.f32.gmra.mxu0 %v505
        %v647 = vpop.f32.mrf.mxu0
        %v648 = vadd.f32 %v452, %v647
        %v649 = vpop.f32.mrf.mxu0
        %650 = vmatprep.mubr.f32.mxu0 0.0
        %651 = vmatmul.mubr.f32.gmra.mxu0 %v508
        %v652 = vpop.f32.mrf.mxu0
        %v653 = vadd.f32 %v457, %v652
        %v654 = vpop.f32.mrf.mxu0
        %655 = vmatprep.mubr.f32.mxu0 0.0
        %656 = vmatmul.mubr.f32.gmra.mxu0 %v511
        %v657 = vpop.f32.mrf.mxu0
        %v658 = vadd.f32 %v462, %v657
        %v659 = vpop.f32.mrf.mxu0
        %660 = vdwg.mxu0
        %s661 = sadd.s32 %s224, 2
        %s662 = smul.u32 %s661, 16
        %s663 = scalar_lea.vmem %s215, %s662
        %v664 = vld [vmem:[%s663] sm:$0xff]
        %v665 = vld [vmem:[%s663 + $0x8] sm:$0xff]
        %v666 = vld [vmem:[%s663 + $0x10] sm:$0xff]
        %v667 = vld [vmem:[%s663 + $0x18] sm:$0xff]
        %v668 = vld [vmem:[%s663 + $0x20] sm:$0xff]
        %v669 = vld [vmem:[%s663 + $0x28] sm:$0xff]
        %v670 = vld [vmem:[%s663 + $0x30] sm:$0xff]
        %v671 = vld [vmem:[%s663 + $0x38] sm:$0xff]
        %v672 = vld [vmem:[%s663 + $0x40] sm:$0xff]
        %v673 = vld [vmem:[%s663 + $0x48] sm:$0xff]
        %v674 = vld [vmem:[%s663 + $0x50] sm:$0xff]
        %v675 = vld [vmem:[%s663 + $0x58] sm:$0xff]
        %v676 = vld [vmem:[%s663 + $0x60] sm:$0xff]
        %v677 = vld [vmem:[%s663 + $0x68] sm:$0xff]
        %v678 = vld [vmem:[%s663 + $0x70] sm:$0xff]
        %v679 = vld [vmem:[%s663 + $0x78] sm:$0xff]
        %s680 = scalar_lea.vmem %s219, 32
        %v681 = vld [vmem:[%s680] sm:$0xff]
        %v682 = vld [vmem:[%s680 + $0x8] sm:$0xf]
        %v684 = vsel %vm267, %v664, 0
        %v687 = vsel %vm267, %v665, 0
        %v690 = vsel %vm267, %v666, 0
        %v693 = vsel %vm267, %v667, 0
        %v696 = vsel %vm267, %v668, 0
        %v699 = vsel %vm267, %v669, 0
        %v702 = vsel %vm267, %v670, 0
        %v705 = vsel %vm267, %v671, 0
        %v708 = vsel %vm267, %v672, 0
        %v711 = vsel %vm267, %v673, 0
        %v714 = vsel %vm267, %v674, 0
        %v717 = vsel %vm267, %v675, 0
        %v720 = vsel %vm267, %v676, 0
        %v723 = vsel %vm267, %v677, 0
        %v726 = vsel %vm267, %v678, 0
        %v729 = vsel %vm267, %v679, 0
        %v732 = vsel %vm316, %v682, 0
        %734 = vmatprep.subr.mxu0 0.0
        %735 = vmatpush1.msra.mxu0 0.0
        %736 = vmatprep.subr.mxu0 0.0
        %737 = vmatpush1.msra.mxu0 0.0
        %738 = vmatprep.subr.mxu0 0.0
        %739 = vmatpush1.msra.mxu0 0.0
        %740 = vmatprep.subr.mxu0 0.0
        %741 = vmatpush1.msra.mxu0 0.0
        %742 = vmatprep.subr.mxu0 0.0
        %743 = vmatpush1.msra.mxu0 0.0
        %744 = vmatprep.subr.mxu0 0.0
        %745 = vmatpush1.msra.mxu0 0.0
        %746 = vmatprep.subr.mxu0 0.0
        %747 = vmatpush1.msra.mxu0 0.0
        %748 = vmatprep.subr.mxu0 0.0
        %749 = vmatpush1.msra.mxu0 0.0
        %750 = vmatprep.subr.mxu0 0.0
        %751 = vmatpush1.msra.mxu0 0.0
        %752 = vmatprep.subr.mxu0 0.0
        %753 = vmatpush1.msra.mxu0 0.0
        %754 = vmatprep.subr.mxu0 0.0
        %755 = vmatpush1.msra.mxu0 0.0
        %756 = vmatprep.subr.mxu0 0.0
        %757 = vmatpush1.msra.mxu0 0.0
        %758 = vmatprep.subr.mxu0 0.0
        %759 = vmatpush1.msra.mxu0 0.0
        %760 = vmatprep.subr.mxu0 0.0
        %761 = vmatpush1.msra.mxu0 0.0
        %762 = vmatprep.subr.mxu0 0.0
        %763 = vmatpush1.msra.mxu0 %v732
        %764 = vmatprep.subr.mxu0 0.0
        %765 = vmatpush1.msra.mxu0 %v681
        %766 = vmatprep.subr.mxu0 0.0
        %767 = vmatpush2.msra.mxu0 0.0
        %768 = vmatprep.subr.mxu0 0.0
        %769 = vmatpush2.msra.mxu0 0.0
        %770 = vmatprep.subr.mxu0 0.0
        %771 = vmatpush2.msra.mxu0 0.0
        %772 = vmatprep.subr.mxu0 0.0
        %773 = vmatpush2.msra.mxu0 0.0
        %774 = vmatprep.subr.mxu0 0.0
        %775 = vmatpush2.msra.mxu0 0.0
        %776 = vmatprep.subr.mxu0 0.0
        %777 = vmatpush2.msra.mxu0 0.0
        %778 = vmatprep.subr.mxu0 0.0
        %779 = vmatpush2.msra.mxu0 0.0
        %780 = vmatprep.subr.mxu0 0.0
        %781 = vmatpush2.msra.mxu0 0.0
        %782 = vmatprep.subr.mxu0 0.0
        %783 = vmatpush2.msra.mxu0 0.0
        %784 = vmatprep.subr.mxu0 0.0
        %785 = vmatpush2.msra.mxu0 0.0
        %786 = vmatprep.subr.mxu0 0.0
        %787 = vmatpush2.msra.mxu0 0.0
        %788 = vmatprep.subr.mxu0 0.0
        %789 = vmatpush2.msra.mxu0 0.0
        %790 = vmatprep.subr.mxu0 0.0
        %791 = vmatpush2.msra.mxu0 0.0
        %792 = vmatprep.subr.mxu0 0.0
        %793 = vmatpush2.msra.mxu0 0.0
        %794 = vmatprep.subr.mxu0 0.0
        %795 = vmatpush2.msra.mxu0 0.0
        %796 = vmatprep.subr.mxu0 0.0
        %797 = vmatpush2.msra.mxu0 0.0
        %798 = vmatprep.mubr.f32.mxu0 0.0
        %799 = vmatmul.mubr.f32.gmra.mxu0 %v684
        %v800 = vpop.f32.mrf.mxu0
        %v801 = vadd.f32 0.0, %v800
        %v802 = vpop.f32.mrf.mxu0
        %803 = vmatprep.mubr.f32.mxu0 0.0
        %804 = vmatmul.mubr.f32.gmra.mxu0 %v687
        %v805 = vpop.f32.mrf.mxu0
        %v806 = vadd.f32 0.0, %v805
        %v807 = vpop.f32.mrf.mxu0
        %808 = vmatprep.mubr.f32.mxu0 0.0
        %809 = vmatmul.mubr.f32.gmra.mxu0 %v690
        %v810 = vpop.f32.mrf.mxu0
        %v811 = vadd.f32 0.0, %v810
        %v812 = vpop.f32.mrf.mxu0
        %813 = vmatprep.mubr.f32.mxu0 0.0
        %814 = vmatmul.mubr.f32.gmra.mxu0 %v693
        %v815 = vpop.f32.mrf.mxu0
        %v816 = vadd.f32 0.0, %v815
        %v817 = vpop.f32.mrf.mxu0
        %818 = vmatprep.mubr.f32.mxu0 0.0
        %819 = vmatmul.mubr.f32.gmra.mxu0 %v696
        %v820 = vpop.f32.mrf.mxu0
        %v821 = vadd.f32 0.0, %v820
        %v822 = vpop.f32.mrf.mxu0
        %823 = vmatprep.mubr.f32.mxu0 0.0
        %824 = vmatmul.mubr.f32.gmra.mxu0 %v699
        %v825 = vpop.f32.mrf.mxu0
        %v826 = vadd.f32 0.0, %v825
        %v827 = vpop.f32.mrf.mxu0
        %828 = vmatprep.mubr.f32.mxu0 0.0
        %829 = vmatmul.mubr.f32.gmra.mxu0 %v702
        %v830 = vpop.f32.mrf.mxu0
        %v831 = vadd.f32 0.0, %v830
        %v832 = vpop.f32.mrf.mxu0
        %833 = vmatprep.mubr.f32.mxu0 0.0
        %834 = vmatmul.mubr.f32.gmra.mxu0 %v705
        %v835 = vpop.f32.mrf.mxu0
        %v836 = vadd.f32 0.0, %v835
        %v837 = vpop.f32.mrf.mxu0
        %838 = vmatprep.mubr.f32.mxu0 0.0
        %839 = vmatmul.mubr.f32.gmra.mxu0 %v708
        %v840 = vpop.f32.mrf.mxu0
        %v841 = vadd.f32 0.0, %v840
        %v842 = vpop.f32.mrf.mxu0
        %843 = vmatprep.mubr.f32.mxu0 0.0
        %844 = vmatmul.mubr.f32.gmra.mxu0 %v711
        %v845 = vpop.f32.mrf.mxu0
        %v846 = vadd.f32 0.0, %v845
        %v847 = vpop.f32.mrf.mxu0
        %848 = vmatprep.mubr.f32.mxu0 0.0
        %849 = vmatmul.mubr.f32.gmra.mxu0 %v714
        %v850 = vpop.f32.mrf.mxu0
        %v851 = vadd.f32 0.0, %v850
        %v852 = vpop.f32.mrf.mxu0
        %853 = vmatprep.mubr.f32.mxu0 0.0
        %854 = vmatmul.mubr.f32.gmra.mxu0 %v717
        %v855 = vpop.f32.mrf.mxu0
        %v856 = vadd.f32 0.0, %v855
        %v857 = vpop.f32.mrf.mxu0
        %858 = vmatprep.mubr.f32.mxu0 0.0
        %859 = vmatmul.mubr.f32.gmra.mxu0 %v720
        %v860 = vpop.f32.mrf.mxu0
        %v861 = vadd.f32 0.0, %v860
        %v862 = vpop.f32.mrf.mxu0
        %863 = vmatprep.mubr.f32.mxu0 0.0
        %864 = vmatmul.mubr.f32.gmra.mxu0 %v723
        %v865 = vpop.f32.mrf.mxu0
        %v866 = vadd.f32 0.0, %v865
        %v867 = vpop.f32.mrf.mxu0
        %868 = vmatprep.mubr.f32.mxu0 0.0
        %869 = vmatmul.mubr.f32.gmra.mxu0 %v726
        %v870 = vpop.f32.mrf.mxu0
        %v871 = vadd.f32 0.0, %v870
        %v872 = vpop.f32.mrf.mxu0
        %873 = vmatprep.mubr.f32.mxu0 0.0
        %874 = vmatmul.mubr.f32.gmra.mxu0 %v729
        %v875 = vpop.f32.mrf.mxu0
        %v876 = vadd.f32 0.0, %v875
        %v877 = vpop.f32.mrf.mxu0
        %878 = vdwg.mxu0
        %v879 = vadd.f32 %v583, %v801
        %v880 = vadd.f32 %v588, %v806
        %v881 = vadd.f32 %v593, %v811
        %v882 = vadd.f32 %v598, %v816
        %v883 = vadd.f32 %v603, %v821
        %v884 = vadd.f32 %v608, %v826
        %v885 = vadd.f32 %v613, %v831
        %v886 = vadd.f32 %v618, %v836
        %v887 = vadd.f32 %v623, %v841
        %v888 = vadd.f32 %v628, %v846
        %v889 = vadd.f32 %v633, %v851
        %v890 = vadd.f32 %v638, %v856
        %v891 = vadd.f32 %v643, %v861
        %v892 = vadd.f32 %v648, %v866
        %v893 = vadd.f32 %v653, %v871
        %v894 = vadd.f32 %v658, %v876
        %v895 = vld [vmem:[%s222] sm:$0x1]
        %v897 = vlaneseq
        %v898 = vshrl.u32 %v897, 7
        %v899 = vsub.s32 0, %v898
        %v900 = vrot.slane %v895, %v899
        %v902 = vadd.f32 %v879, %v900
        %v903 = vadd.f32 %v880, %v900
        %v904 = vadd.f32 %v881, %v900
        %v905 = vadd.f32 %v882, %v900
        %v906 = vadd.f32 %v883, %v900
        %v907 = vadd.f32 %v884, %v900
        %v908 = vadd.f32 %v885, %v900
        %v909 = vadd.f32 %v886, %v900
        %v910 = vadd.f32 %v887, %v900
        %v911 = vadd.f32 %v888, %v900
        %v912 = vadd.f32 %v889, %v900
        %v913 = vadd.f32 %v890, %v900
        %v914 = vadd.f32 %v891, %v900
        %v915 = vadd.f32 %v892, %v900
        %v916 = vadd.f32 %v893, %v900
        %v917 = vadd.f32 %v894, %v900
        %v918 = vmax.f32 %v902, 0.0
        %v919 = vmax.f32 %v903, 0.0
        %v920 = vmax.f32 %v904, 0.0
        %v921 = vmax.f32 %v905, 0.0
        %v922 = vmax.f32 %v906, 0.0
        %v923 = vmax.f32 %v907, 0.0
        %v924 = vmax.f32 %v908, 0.0
        %v925 = vmax.f32 %v909, 0.0
        %v926 = vmax.f32 %v910, 0.0
        %v927 = vmax.f32 %v911, 0.0
        %v928 = vmax.f32 %v912, 0.0
        %v929 = vmax.f32 %v913, 0.0
        %v930 = vmax.f32 %v914, 0.0
        %v931 = vmax.f32 %v915, 0.0
        %v932 = vmax.f32 %v916, 0.0
        %v933 = vmax.f32 %v917, 0.0
        %934 = vst [vmem:[%s210] sm:$0xff] %v918
        %935 = vst [vmem:[%s210 + $0x8] sm:$0xff] %v919
        %936 = vst [vmem:[%s210 + $0x10] sm:$0xff] %v920
        %937 = vst [vmem:[%s210 + $0x18] sm:$0xff] %v921
        %938 = vst [vmem:[%s210 + $0x20] sm:$0xff] %v922
        %939 = vst [vmem:[%s210 + $0x28] sm:$0xff] %v923
        %940 = vst [vmem:[%s210 + $0x30] sm:$0xff] %v924
        %941 = vst [vmem:[%s210 + $0x38] sm:$0xff] %v925
        %942 = vst [vmem:[%s210 + $0x40] sm:$0xff] %v926
        %943 = vst [vmem:[%s210 + $0x48] sm:$0xff] %v927
        %944 = vst [vmem:[%s210 + $0x50] sm:$0xff] %v928
        %945 = vst [vmem:[%s210 + $0x58] sm:$0xff] %v929
        %946 = vst [vmem:[%s210 + $0x60] sm:$0xff] %v930
        %947 = vst [vmem:[%s210 + $0x68] sm:$0xff] %v931
        %948 = vst [vmem:[%s210 + $0x70] sm:$0xff] %v932
        %949 = vst [vmem:[%s210 + $0x78] sm:$0xff] %v933
        %s950 = sand.u32 %s126, 1
        %s951 = scalar_lea.sflag [#allocation3], %s950
        %s952 = sand.u32 %s126, 1
        %s953 = smul.addr %s952, 128
        %s954 = scalar_lea.vmem [#allocation2], %s953
        // Predicated region
        $region33: #{tpu_custom_call.1} parent=31 // pred_check
          %p955 = pneg %p136
        $region34: #{tpu_custom_call.1} parent=31 // pred_check_branch
          %957 = sbr.rel (%p955) target = $region36
        $region35: #{tpu_custom_call.1} parent=31 // pred_region
          %s958 = smul.u32 8, %s24
          %s960 = ssub.s32 2048, 2048
          %961 = vsyncadd %s951, %s960
          %s962 = smul.addr %s958, 2
          %s963 = sadd.s32 %s23, %s962
          %s964 = smul.addr %s22, 32
          %s965 = sadd.s32 %s963, %s964
          %s966 = smul.addr %s965, 128
          %s967 = scalar_lea.hbm %s3, %s966
          %s968 = sshll.u32 %s954, 4
          %s969 = int_to_ptr.vmem [resolvable:$true] %s968
          %974 = dma.vmem_to_hbm [thread:$0]  %s969, 2048, %s967, %s951, 128, 128, 8
        $region36: #{tpu_custom_call.1} parent=31 // pred_fallthru
          _
      $region32: #{tpu_custom_call.1} parent=5 // pred_fallthru
        _
      %p975 = scmp.le.s32.totalorder 2, %s12
      // Predicated region
      $region37: #{tpu_custom_call.1} parent=5 // pred_check
        %p976 = pneg %p975
      $region38: #{tpu_custom_call.1} parent=5 // pred_check_branch
        %978 = sbr.rel (%p976) target = $region40
      $region39: #{tpu_custom_call.1} parent=5 // pred_region
        %s979 = ssub.s32 %s12, 2
        // Predicated region
        $region41: #{tpu_custom_call.1} parent=39 // pred_check
          %p980 = pneg %p142
        $region42: #{tpu_custom_call.1} parent=39 // pred_check_branch
          %982 = sbr.rel (%p980) target = $region44
        $region43: #{tpu_custom_call.1} parent=39 // pred_region
          %s983 = sand.u32 %s127, 1
          %s984 = scalar_lea.sflag [#allocation3], %s983
          %s985 = sand.u32 %s127, 1
          %s986 = smul.addr %s985, 128
          %s987 = scalar_lea.vmem [#allocation2], %s986
          %988 = dma.done %s984, 2048
        $region44: #{tpu_custom_call.1} parent=39 // pred_fallthru
          _
      $region40: #{tpu_custom_call.1} parent=5 // pred_fallthru
        _
    $region6: #{tpu_custom_call.1} parent=1 // loop_footer
      %s16 = sadd.s32 1, %s12
    $region7: #{tpu_custom_call.1} parent=1 // loop_footer_branch
      %11 = sbr.rel target = $region3
    $region8: #{tpu_custom_call.1} parent=1 // loop_exit
      _
    %989 = vsyncpa [#allocation3], 1
    %s990 = scalar_lea.sflag [#allocation3], 1
    %991 = vsyncpa %s990, 1

</llo_original>
